<compile_context>
chip_gen: v5e
topology: v5e:2x2
jax: 0.10.0
libtpu: 0.0.40
codegen_flags: <defaults>
</compile_context>

<pallas_src>
import math

import jax
import jax.numpy as jnp
from jax.experimental import pallas as pl
from jax.experimental.pallas import tpu as pltpu


def _device_tuning():
    """Per-generation block-size / VMEM-limit / parallelism knobs."""
    kind = ""
    try:
        kind = jax.devices()[0].device_kind.lower()
    except Exception:
        pass
    if "v7" in kind or "7x" in kind:
        # 64 MiB VMEM, 3.2 TB/s HBM, 2 TCs: modest blocks, feed both cores.
        return dict(target_bytes=2 << 20, vmem_limit=32 << 20,
                    min_parallel_steps=4, bf16_native=True)
    if "v6" in kind:
        # 128 MiB VMEM, native bf16 VPU: big blocks amortize per-step overhead.
        return dict(target_bytes=6 << 20, vmem_limit=64 << 20,
                    min_parallel_steps=1, bf16_native=True)
    if "v5" in kind:
        # v5e: lowest HBM BW, 1 vst slot, no bf16 VALU -> big blocks, f32 math.
        return dict(target_bytes=6 << 20, vmem_limit=64 << 20,
                    min_parallel_steps=1, bf16_native=False)
    # Unknown chip / interpret mode: stay conservative.
    return dict(target_bytes=2 << 20, vmem_limit=None,
                min_parallel_steps=1, bf16_native=False)


def _lane_fold(T, width):
    """Smallest k with (k*width) % 128 == 0 and T % k == 0 (else 1).

    Folding k rows into the lane dim makes the output lane-dense so every
    store is an unmasked `vst` instead of `vst.msk`."""
    if width % 128 == 0:
        return 1
    k = 128 // math.gcd(width, 128)
    if k > 1 and T % k == 0:
        return k
    return 1


def _choose_rows_tile(n_rows, lanes, itemsize, *, target_bytes, min_steps=1):
    """Row-tile: ~target_bytes per block, dtype-aware sublane multiple, and
    (on v7x) capped so the parallel grid has >= min_steps steps."""
    mult = max(8, 32 // itemsize)          # f32: 8, bf16: 16, int8/fp8: 32
    if n_rows <= mult:
        return n_rows                      # full dim is always a legal block
    bytes_per_row = max(1, lanes * itemsize)
    tt = max(mult, (target_bytes // bytes_per_row) // mult * mult)
    if min_steps > 1:
        cap = (-(-n_rows // min_steps)) // mult * mult   # ceil(n/steps) -> mult
        tt = min(tt, max(mult, cap))
    return n_rows if tt >= n_rows else tt


def _feature_dropout_kernel(x_ref, m_ref, o_ref):
    """out = x * mask (mask already holds 1/(1-p) or 0; dtype chosen in wrapper).

    Works for both layouts via broadcasting:
      flattened : x_ref (tt, L),    m_ref (1, L)
      batch1st  : x_ref (1, tt, L), m_ref (1, 1, L)
    """
    o_ref[...] = (x_ref[...] * m_ref[...]).astype(o_ref.dtype)


def _scaled_keep_mask(seed, p, shape):
    """(B, D) keep-mask with the 1/(1-p) rescale folded in, in float32."""
    key = jax.random.PRNGKey(seed)
    keep = jax.random.bernoulli(key, 1.0 - p, shape)
    scale = jnp.float32(1.0 / (1.0 - p))
    return jnp.where(keep, scale, jnp.float32(0.0))


def fairseq_feature_dropout(x, p, seed, *, batch_first=False, training=True):
    """JAX/Pallas equivalent of FairseqFeatureDropout.forward."""
    p = float(p)
    if (not training) or p == 0.0:
        return x
    if p >= 1.0:
        # dropout with p=1 zeroes everything; avoid 0 * inf = NaN.
        return jnp.zeros_like(x)

    assert x.ndim == 3, "FairseqFeatureDropout expects a 3-D input"
    itemsize = jnp.dtype(x.dtype).itemsize
    tune = _device_tuning()
    mask_dtype = (x.dtype if (tune["bf16_native"] and x.dtype == jnp.bfloat16)
                  else jnp.float32)
    cp = dict(vmem_limit_bytes=tune["vmem_limit"])

    if batch_first:
        # x: (B, T, D); mask per (B, D), broadcast over T. Per-B mask row is
        # picked via the index_map -- no wrapper transpose.
        B, T, D = x.shape
        mask = _scaled_keep_mask(seed, p, (B, D)).astype(mask_dtype)
        k = _lane_fold(T, D)                       # lane-dense fold when D % 128 != 0
        Tk, Dk = T // k, k * D
        xk = x.reshape(B, Tk, Dk)                  # contiguous reshape: free
        mk = jnp.tile(mask, (1, k)).reshape(B, 1, Dk)   # mask stays tiny
        min_steps = -(-tune["min_parallel_steps"] // max(1, B))  # ceil
        tt = _choose_rows_tile(Tk, Dk, itemsize,
                               target_bytes=tune["target_bytes"],
                               min_steps=min_steps)
        out = pl.pallas_call(
            _feature_dropout_kernel,
            out_shape=jax.ShapeDtypeStruct((B, Tk, Dk), x.dtype),
            grid=(B, pl.cdiv(Tk, tt)),
            in_specs=[
                pl.BlockSpec((1, tt, Dk), lambda b, t: (b, t, 0)),
                pl.BlockSpec((1, 1, Dk), lambda b, t: (b, 0, 0)),
            ],
            out_specs=pl.BlockSpec((1, tt, Dk), lambda b, t: (b, t, 0)),
            compiler_params=pltpu.CompilerParams(
                dimension_semantics=("parallel", "parallel"), **cp),
        )(xk, mk)
        return out.reshape(B, T, D)

    # batch_first=False: x is (T, B, D). Flatten features to (T, B*D) so the
    # lane dim is as wide as possible; if B*D is not a multiple of 128, fold k
    # consecutive T rows into the lane dim for fully dense vector stores.
    T, B, D = x.shape
    N = B * D
    mask = _scaled_keep_mask(seed, p, (B, D)).astype(mask_dtype).reshape(1, N)
    k = _lane_fold(T, N)
    Tk, Nk = T // k, k * N
    x2 = x.reshape(Tk, Nk)                         # contiguous reshape: free
    mk = jnp.tile(mask, (1, k))                    # (1, k*N), still tiny
    tt = _choose_rows_tile(Tk, Nk, itemsize,
                           target_bytes=tune["target_bytes"],
                           min_steps=tune["min_parallel_steps"])
    out2 = pl.pallas_call(
        _feature_dropout_kernel,
        out_shape=jax.ShapeDtypeStruct((Tk, Nk), x.dtype),
        grid=(pl.cdiv(Tk, tt),),
        in_specs=[
            pl.BlockSpec((tt, Nk), lambda i: (i, 0)),
            pl.BlockSpec((1, Nk), lambda i: (0, 0)),
        ],
        out_specs=pl.BlockSpec((tt, Nk), lambda i: (i, 0)),
        compiler_params=pltpu.CompilerParams(
            dimension_semantics=("parallel",), **cp),
    )(x2, mk)
    return out2.reshape(T, B, D)


if __name__ == "__main__":
    key = jax.random.PRNGKey(0)
    T, B, D = 8, 2, 32          # (seq, batch, hidden), small shapes
    p = 0.5
    scale = 1.0 / (1.0 - p)
    x = jax.random.normal(key, (T, B, D), dtype=jnp.float32)

    # --- batch_first=False path (T, B, D) ---
    out = fairseq_feature_dropout(x, p, seed=1234, batch_first=False, training=True)
    out = jax.block_until_ready(out)
    x_np = jax.device_get(x)
    out_np = jax.device_get(out)
    zero_mask = out_np == 0.0                               # (T, B, D)
    # 1) Drop pattern is a whole feature channel: constant along the T axis.
    assert bool((zero_mask == zero_mask[0:1]).all()), "mask not broadcast over seq axis"
    # 2) Kept values are rescaled by 1/(1-p).
    kept = ~zero_mask
    assert bool(
        jnp.allclose(out_np[kept], (x_np * scale)[kept], rtol=1e-5, atol=1e-5)
    ), "kept values not scaled by 1/(1-p)"

    # --- batch_first=True path (B, T, D), handled in-kernel (no transpose) ---
    x_bf = jnp.transpose(x, (1, 0, 2))
    out_bf = fairseq_feature_dropout(x_bf, p, seed=1234, batch_first=True, training=True)
    out_bf = jax.block_until_ready(out_bf)
    zb = jax.device_get(out_bf) == 0.0                      # (B, T, D)
    assert bool((zb == zb[:, 0:1, :]).all()), "batch_first mask not broadcast over seq axis"
    kept_bf = ~zb
    assert bool(
        jnp.allclose(jax.device_get(out_bf)[kept_bf],
                     (jax.device_get(x_bf) * scale)[kept_bf], rtol=1e-5, atol=1e-5)
    ), "batch_first kept values not scaled by 1/(1-p)"

    # --- bf16 smoke test (exercises dtype-aware sublane tile + packed mask) ---
    x16 = jax.random.normal(key, (T, B, D), dtype=jnp.bfloat16)
    out16 = fairseq_feature_dropout(x16, p, seed=7, batch_first=False, training=True)
    out16 = jax.block_until_ready(out16)
    o16 = jax.device_get(out16).astype(jnp.float32)
    x16f = jax.device_get(x16).astype(jnp.float32)
    z16 = o16 == 0.0
    assert bool((z16 == z16[0:1]).all()), "bf16 mask not broadcast over seq axis"
    assert bool(
        jnp.allclose(o16[~z16], (x16f * scale)[~z16], rtol=1e-2, atol=1e-2)
    ), "bf16 kept values not scaled by 1/(1-p)"

    # --- eval mode: identity; p=1: all zeros ---
    out_eval = fairseq_feature_dropout(x, p, seed=1234, training=False)
    assert bool(jnp.array_equal(out_eval, x))
    out_p1 = fairseq_feature_dropout(x, 1.0, seed=1234, training=True)
    assert bool(jnp.array_equal(out_p1, jnp.zeros_like(x)))

    print("KERNEL_OK")
</pallas_src>

<mosaic_0001>
module attributes {stable_mosaic.version = 11 : i64} {
  func.func @_feature_dropout_kernel(%arg0: i32, %arg1: memref<4x128xf32, #tpu.memory_space<vmem>>, %arg2: memref<1x128xf32, #tpu.memory_space<vmem>>, %arg3: memref<4x128xf32, #tpu.memory_space<vmem>>) attributes {dimension_semantics = [#tpu.dimension_semantics<parallel>], iteration_bounds = array<i64: 1>, scalar_prefetch = 0 : i64, scratch_operands = 0 : i64, tpu.core_type = #tpu.core_type<tc>, window_params = [{transform_indices = @transform_0, window_bounds = array<i64: 4, 128>}, {pipeline_mode = #tpu.pipeline_mode<synchronous>, transform_indices = @transform_1, window_bounds = array<i64: 1, 128>}, {transform_indices = @transform_2, window_bounds = array<i64: 4, 128>}]} {
    %c0 = arith.constant 0 : index
    %c0_0 = arith.constant 0 : index
    %0 = vector.load %arg1[%c0, %c0_0] : memref<4x128xf32, #tpu.memory_space<vmem>>, vector<4x128xf32>
    %c0_1 = arith.constant 0 : index
    %c0_2 = arith.constant 0 : index
    %1 = vector.load %arg2[%c0_1, %c0_2] : memref<1x128xf32, #tpu.memory_space<vmem>>, vector<1x128xf32>
    %2 = vector.broadcast %1 : vector<1x128xf32> to vector<4x128xf32>
    %3 = arith.mulf %0, %2 : vector<4x128xf32>
    %c0_3 = arith.constant 0 : index
    %c0_4 = arith.constant 0 : index
    %4 = vector.load %arg3[%c0_3, %c0_4] : memref<4x128xf32, #tpu.memory_space<vmem>>, vector<4x128xf32>
    tpu.vector_store %arg3[%c0_3, %c0_4], %3 {strides = array<i32>} : memref<4x128xf32, #tpu.memory_space<vmem>>, vector<4x128xf32>,
    return
  }
  func.func @transform_0(%arg0: i32) -> (i32, i32) {
    %c0_i32 = arith.constant 0 : i32
    %c0_i32_0 = arith.constant 0 : i32
    return %arg0, %c0_i32 : i32, i32
  }
  func.func @transform_1(%arg0: i32) -> (i32, i32) {
    %c0_i32 = arith.constant 0 : i32
    %c0_i32_0 = arith.constant 0 : i32
    %c0_i32_1 = arith.constant 0 : i32
    return %c0_i32, %c0_i32_0 : i32, i32
  }
  func.func @transform_2(%arg0: i32) -> (i32, i32) {
    %c0_i32 = arith.constant 0 : i32
    %c0_i32_0 = arith.constant 0 : i32
    return %arg0, %c0_i32 : i32, i32
  }
}

</mosaic_0001>

<llo_original>
// kernel: tpu_custom_call.1
$region0: #{tpu_custom_call.1}
  #allocation0 [shape = 'u32[]', space=smem, size = 0x4, offset = 0x4, fixed_abs, tag = 'smem constant byte address 0x4 - core index']
  #allocation1 [shape = 'u32[72,128]{1,0:T(1,128)}', space=vmem, size = 0x9000, scoped, tag = 'internal scratch']
  %s0 = inlined_call_operand.hbm [shape: f32[4,128], index: 0, kind: input, shape index: {}]
  %s1 = inlined_call_operand.hbm [shape: f32[1,128], index: 1, kind: input, shape index: {}]
  %s2 = inlined_call_operand.hbm [shape: f32[4,128], index: 2, kind: output, shape index: {}]
  %s3 = sld [smem:[#allocation0]]
  $region26: #{tpu_custom_call.1} parent=0
    _
  %s5 = ssub.s32 1, %s3
  %s6 = scalar_select 0, %s5, %s3
  $region1: #{tpu_custom_call.1} parent=0
    #allocation2 [shape = 'u8[2048]{0}', space=vmem, size = 0x800, scoped, tag = 'input window, operand 0, single buffered']
    #allocation3 [shape = 's32[1]{0}', space=sflag, size = 0x4, scoped, tag = 'scoped memory for tpu_custom_call.1']
    #allocation4 [shape = 's32[1]{0}', space=sflag, size = 0x4, scoped, tag = 'scoped memory for tpu_custom_call.1']
    #allocation5 [shape = 'u8[512]{0}', space=vmem, size = 0x400, scoped, tag = 'input window, operand 1, single buffered']
    #allocation6 [shape = 's32[1]{0}', space=sflag, size = 0x4, scoped, tag = 'scoped memory for tpu_custom_call.1']
    #allocation7 [shape = 'u8[2048]{0}', space=vmem, size = 0x800, scoped, tag = 'output window, operand 0, single buffered']
    %7 = vsyncpa [#allocation3], 0
    %8 = vsyncpa [#allocation6], 0
    %9 = vsyncpa [#allocation4], 0
    // Predicated region
    $region2: #{tpu_custom_call.1} parent=1 // pred_check
      _
    $region3: #{tpu_custom_call.1} parent=1 // pred_check_branch
      %11 = sbr.rel (0) target = $region5
    $region4: #{tpu_custom_call.1} parent=1 // pred_region
      %13 = vsyncadd [#allocation3], 0
      %s15 = sshll.u32 %s0, 4
      %s16 = int_to_ptr.hbm [resolvable:$true] %s15
      %s17 = sshll.u32 [#allocation2], 4
      %s18 = int_to_ptr.vmem [resolvable:$true] %s17
      %20 = dma.hbm_to_vmem [thread:$0]  %s16, 64, %s18, [#allocation3]
    $region5: #{tpu_custom_call.1} parent=1 // pred_fallthru
      _
    // Predicated region
    $region6: #{tpu_custom_call.1} parent=1 // pred_check
      _
    $region7: #{tpu_custom_call.1} parent=1 // pred_check_branch
      %22 = sbr.rel (0) target = $region9
    $region8: #{tpu_custom_call.1} parent=1 // pred_region
      %24 = vsyncadd [#allocation6], 0
      %s26 = sshll.u32 %s1, 4
      %s27 = int_to_ptr.hbm [resolvable:$true] %s26
      %s28 = sshll.u32 [#allocation5], 4
      %s29 = int_to_ptr.vmem [resolvable:$true] %s28
      %31 = dma.hbm_to_vmem [thread:$0]  %s27, 16, %s29, [#allocation6]
    $region9: #{tpu_custom_call.1} parent=1 // pred_fallthru
      _
    // Predicated region
    $region10: #{tpu_custom_call.1} parent=1 // pred_check
      _
    $region11: #{tpu_custom_call.1} parent=1 // pred_check_branch
      %33 = sbr.rel (0) target = $region13
    $region12: #{tpu_custom_call.1} parent=1 // pred_region
      %35 = dma.done [#allocation3], 64
    $region13: #{tpu_custom_call.1} parent=1 // pred_fallthru
      _
    // Predicated region
    $region14: #{tpu_custom_call.1} parent=1 // pred_check
      _
    $region15: #{tpu_custom_call.1} parent=1 // pred_check_branch
      %37 = sbr.rel (0) target = $region17
    $region16: #{tpu_custom_call.1} parent=1 // pred_region
      %39 = dma.done [#allocation6], 16
    $region17: #{tpu_custom_call.1} parent=1 // pred_fallthru
      _
    %v40 = vld [vmem:[#allocation2] sm:$0xf]
    %v41 = vld [vmem:[#allocation5] sm:$0x1]
    %v43 = vperm.slane %v41, 0
    %v45 = vmul.f32 %v40, %v43
    %46 = vst [vmem:[#allocation7] sm:$0xf] %v45
    // Predicated region
    $region18: #{tpu_custom_call.1} parent=1 // pred_check
      _
    $region19: #{tpu_custom_call.1} parent=1 // pred_check_branch
      %48 = sbr.rel (0) target = $region21
    $region20: #{tpu_custom_call.1} parent=1 // pred_region
      %50 = vsyncadd [#allocation4], 0
      %s52 = sshll.u32 [#allocation7], 4
      %s53 = int_to_ptr.vmem [resolvable:$true] %s52
      %s54 = sshll.u32 %s2, 4
      %s55 = int_to_ptr.hbm [resolvable:$true] %s54
      %57 = dma.vmem_to_hbm [thread:$0]  %s53, 64, %s55, [#allocation4]
    $region21: #{tpu_custom_call.1} parent=1 // pred_fallthru
      _
    // Predicated region
    $region22: #{tpu_custom_call.1} parent=1 // pred_check
      _
    $region23: #{tpu_custom_call.1} parent=1 // pred_check_branch
      %59 = sbr.rel (0) target = $region25
    $region24: #{tpu_custom_call.1} parent=1 // pred_region
      %61 = dma.done [#allocation4], 64
    $region25: #{tpu_custom_call.1} parent=1 // pred_fallthru
      _
    %62 = vsyncpa [#allocation3], 1
    %63 = vsyncpa [#allocation6], 1
    %64 = vsyncpa [#allocation4], 1

</llo_original>
